<compile_context>
chip_gen: v7x
topology: tpu7x:2x2x1
jax: 0.10.0
libtpu: 0.0.40
codegen_flags: <defaults>
</compile_context>

<pallas_src>
import functools
import math

import jax
import jax.numpy as jnp
from jax.experimental import pallas as pl
from jax.experimental.pallas import tpu as pltpu


# --------------------------------------------------------------------------
# Pallas kernel: fused hash + normalization + MLP
# --------------------------------------------------------------------------
def _dhe_kernel(ids_ref, ha_ref, hb_ref, wh_ref, bh_ref, wo_ref, bo_ref,
                out_ref, *, hs_scale):
    # ids_ref: (tb, 1)   int32  -- raw ids for this batch tile
    # ha_ref : (1, rank) int32  -- multiply-add hash multipliers (odd)
    # hb_ref : (1, rank) int32  -- hash offsets
    # wh_ref : (n_hidden, rank, rank) bf16 -- hidden weights, (in, out) layout
    # bh_ref : (n_hidden, 1, rank)    f32  -- hidden biases
    # wo_ref : (rank, dim) bf16            -- output weight, (in, out) layout
    # bo_ref : (1, dim)    f32             -- output bias
    # out_ref: (tb, dim)   f32

    # ---- fused MultiHash + normalization (VPU) ----
    # 32-bit multiply-add hash, wrapping mod 2**32.  Interpreting the result
    # as int32 and scaling by 1/(2**31 * sqrt(rank)) gives values uniform in
    # [-1/sqrt(rank), 1/sqrt(rank)), i.e. (2*hash/range - 1)/sqrt(num_hashes).
    hv = ids_ref[...] * ha_ref[...] + hb_ref[...]          # (tb, rank) int32
    h = hv.astype(jnp.float32) * jnp.float32(hs_scale)     # (tb, rank) f32

    # ---- MLP: n_hidden x (Linear + ReLU), then final Linear (MXU) ----
    n_hidden = wh_ref.shape[0]
    for i in range(n_hidden):          # static, small trip count -> unrolled
        z = jnp.dot(h.astype(jnp.bfloat16), wh_ref[i],
                    preferred_element_type=jnp.float32)
        h = jnp.maximum(z + bh_ref[i], 0.0)
    out = jnp.dot(h.astype(jnp.bfloat16), wo_ref[...],
                  preferred_element_type=jnp.float32)
    out_ref[...] = (out + bo_ref[...]).astype(out_ref.dtype)


def _pick_tile_b(batch, rank):
    # Largest power-of-two tile that (a) divides the batch, (b) keeps the
    # (tile_b, rank) f32 intermediate under ~256 KiB, and (c) leaves >= 2 grid
    # steps when possible (so v7x's two TensorCores both get work).
    cap = max(8, min(1024, (256 * 1024) // (4 * rank)))
    candidates = [c for c in (1024, 512, 256, 128, 64, 32, 16, 8)
                  if c <= cap and batch % c == 0]
    for c in candidates:
        if batch // c >= 2:
            return c
    return candidates[0] if candidates else batch   # fallback: single tile


def deep_hash_embedding(x_ids, params, rank):
    """Forward pass of DeepHashEmbedding as a single fused Pallas kernel."""
    (batch,) = x_ids.shape
    w_hidden = params["w_hidden"]
    n_hidden = w_hidden.shape[0]
    dim = params["w_out"].shape[1]

    tile_b = _pick_tile_b(batch, rank)

    ids2 = x_ids.astype(jnp.int32).reshape(batch, 1)
    ha = params["hash_a"].astype(jnp.int32).reshape(1, rank)
    hb = params["hash_b"].astype(jnp.int32).reshape(1, rank)
    wh = w_hidden.astype(jnp.bfloat16)        # MXU-native, halves weight bytes
    wo = params["w_out"].astype(jnp.bfloat16)
    bh = params["b_hidden"].astype(jnp.float32)
    bo = params["b_out"].astype(jnp.float32)

    hs_scale = 1.0 / (2.0 ** 31) / math.sqrt(rank)

    flops = 2 * batch * rank * (n_hidden * rank + dim)
    bytes_accessed = (batch * 4 + batch * dim * 4         # ids in, f32 out
                      + wh.size * 2 + wo.size * 2         # bf16 weights
                      + bh.size * 4 + bo.size * 4         # biases
                      + 2 * rank * 4)                     # hash params

    kernel = functools.partial(_dhe_kernel, hs_scale=hs_scale)

    # Constant-index weight/bias blocks stay resident in VMEM across the grid.
    # TODO(synk): for scaled-up configs on v7x (e.g. n_hidden=4, rank=1024 ->
    # 16 MiB weights) single-buffer these specs (pl.Buffered(1)) or pin them
    # with memory_space=VMEM to halve weight VMEM.
    return pl.pallas_call(
        kernel,
        out_shape=jax.ShapeDtypeStruct((batch, dim), jnp.float32),
        grid=(batch // tile_b,),
        in_specs=[
            pl.BlockSpec((tile_b, 1), lambda i: (i, 0)),               # ids
            pl.BlockSpec((1, rank), lambda i: (0, 0)),                 # hash_a
            pl.BlockSpec((1, rank), lambda i: (0, 0)),                 # hash_b
            pl.BlockSpec((n_hidden, rank, rank), lambda i: (0, 0, 0)), # w_hidden
            pl.BlockSpec((n_hidden, 1, rank), lambda i: (0, 0, 0)),    # b_hidden
            pl.BlockSpec((rank, dim), lambda i: (0, 0)),               # w_out
            pl.BlockSpec((1, dim), lambda i: (0, 0)),                  # b_out
        ],
        out_specs=pl.BlockSpec((tile_b, dim), lambda i: (i, 0)),
        compiler_params=pltpu.CompilerParams(
            dimension_semantics=("parallel",),
            vmem_limit_bytes=32 * 1024 * 1024,
        ),
        cost_estimate=pl.CostEstimate(
            flops=flops, transcendentals=0, bytes_accessed=bytes_accessed),
    )(ids2, ha, hb, wh, bh, wo, bo)


# --------------------------------------------------------------------------
# Pure-JAX reference (same math: 32-bit hash, bf16 matmul inputs, f32 accum)
# --------------------------------------------------------------------------
def deep_hash_embedding_ref(x_ids, params, rank):
    hs_scale = jnp.float32(1.0 / (2.0 ** 31) / math.sqrt(rank))
    x = x_ids.astype(jnp.int32)[:, None]
    hv = (x * params["hash_a"].astype(jnp.int32)[None, :]
          + params["hash_b"].astype(jnp.int32)[None, :])
    h = hv.astype(jnp.float32) * hs_scale
    wh = params["w_hidden"].astype(jnp.bfloat16)
    wo = params["w_out"].astype(jnp.bfloat16)
    n_hidden = wh.shape[0]
    for i in range(n_hidden):
        z = jnp.dot(h.astype(jnp.bfloat16), wh[i],
                    preferred_element_type=jnp.float32)
        h = jnp.maximum(z + params["b_hidden"][i, 0], 0.0)
    out = jnp.dot(h.astype(jnp.bfloat16), wo,
                  preferred_element_type=jnp.float32)
    return out + params["b_out"][0]


# --------------------------------------------------------------------------
# Deterministic parameter init (mirrors DeepHashEmbedding.__init__/reset)
# --------------------------------------------------------------------------
def init_params(key, rank, dim, n_hidden):
    ks = jax.random.split(key, 6)
    bound_w = rank ** (-0.5)          # nn.init.uniform_(weight, -r^-.5, r^-.5)
    bound_b = 1.0 / math.sqrt(rank)   # default nn.Linear bias init
    w_hidden = jax.random.uniform(ks[0], (n_hidden, rank, rank), jnp.float32,
                                  -bound_w, bound_w)
    b_hidden = jax.random.uniform(ks[1], (n_hidden, 1, rank), jnp.float32,
                                  -bound_b, bound_b)
    w_out = jax.random.uniform(ks[2], (rank, dim), jnp.float32, -bound_w, bound_w)
    b_out = jax.random.uniform(ks[3], (1, dim), jnp.float32, -bound_b, bound_b)
    # TODO(synk): original hash.MultiHash uses 64-bit universal hashing with
    # output_range=2**62; TPU/Pallas lacks int64 by default, so we use a 32-bit
    # multiply-add hash (wrapping mod 2**32) -- same uniform feature semantics,
    # different hash family.
    hash_a = jax.random.randint(ks[4], (rank,), 1, 2 ** 31 - 1, jnp.int32) | 1
    hash_b = jax.random.randint(ks[5], (rank,), 0, 2 ** 31 - 1, jnp.int32)
    return dict(w_hidden=w_hidden, b_hidden=b_hidden, w_out=w_out, b_out=b_out,
                hash_a=hash_a, hash_b=hash_b)


if __name__ == "__main__":
    rank, dim, n_hidden = 32, 16, 2
    batch = 128

    key = jax.random.PRNGKey(0)
    pkey, xkey = jax.random.split(key)
    params = init_params(pkey, rank, dim, n_hidden)
    x_ids = jax.random.randint(xkey, (batch,), 0, 1_000_000, jnp.int32)

    out = deep_hash_embedding(x_ids, params, rank)
    out = jax.block_until_ready(out)

    ref = deep_hash_embedding_ref(x_ids, params, rank)
    assert out.shape == (batch, dim)
    assert jnp.allclose(out, ref, atol=1e-4, rtol=1e-4), "mismatch vs reference"

    print("KERNEL_OK")
</pallas_src>

<mosaic_0001>
module attributes {stable_mosaic.version = 11 : i64} {
  func.func @_dhe_kernel(%arg0: i32, %arg1: memref<64x1xi32, #tpu.memory_space<vmem>>, %arg2: memref<1x32xi32, #tpu.memory_space<vmem>>, %arg3: memref<1x32xi32, #tpu.memory_space<vmem>>, %arg4: memref<2x32x32xbf16, #tpu.memory_space<vmem>>, %arg5: memref<2x1x32xf32, #tpu.memory_space<vmem>>, %arg6: memref<32x16xbf16, #tpu.memory_space<vmem>>, %arg7: memref<1x16xf32, #tpu.memory_space<vmem>>, %arg8: memref<64x16xf32, #tpu.memory_space<vmem>>) attributes {dimension_semantics = [#tpu.dimension_semantics<parallel>], iteration_bounds = array<i64: 2>, scalar_prefetch = 0 : i64, scratch_operands = 0 : i64, tpu.core_type = #tpu.core_type<tc>, window_params = [{transform_indices = @transform_0, window_bounds = array<i64: 64, 1>}, {pipeline_mode = #tpu.pipeline_mode<synchronous>, transform_indices = @transform_1, window_bounds = array<i64: 1, 32>}, {pipeline_mode = #tpu.pipeline_mode<synchronous>, transform_indices = @transform_2, window_bounds = array<i64: 1, 32>}, {pipeline_mode = #tpu.pipeline_mode<synchronous>, transform_indices = @transform_3, window_bounds = array<i64: 2, 32, 32>}, {pipeline_mode = #tpu.pipeline_mode<synchronous>, transform_indices = @transform_4, window_bounds = array<i64: 2, 1, 32>}, {pipeline_mode = #tpu.pipeline_mode<synchronous>, transform_indices = @transform_5, window_bounds = array<i64: 32, 16>}, {pipeline_mode = #tpu.pipeline_mode<synchronous>, transform_indices = @transform_6, window_bounds = array<i64: 1, 16>}, {transform_indices = @transform_7, window_bounds = array<i64: 64, 16>}]} {
    %c0 = arith.constant 0 : index
    %c0_0 = arith.constant 0 : index
    %0 = vector.load %arg1[%c0, %c0_0] : memref<64x1xi32, #tpu.memory_space<vmem>>, vector<64x1xi32>
    %c0_1 = arith.constant 0 : index
    %c0_2 = arith.constant 0 : index
    %1 = vector.load %arg2[%c0_1, %c0_2] : memref<1x32xi32, #tpu.memory_space<vmem>>, vector<1x32xi32>
    %2 = vector.broadcast %0 : vector<64x1xi32> to vector<64x32xi32>
    %3 = vector.broadcast %1 : vector<1x32xi32> to vector<64x32xi32>
    %4 = arith.muli %2, %3 : vector<64x32xi32>
    %c0_3 = arith.constant 0 : index
    %c0_4 = arith.constant 0 : index
    %5 = vector.load %arg3[%c0_3, %c0_4] : memref<1x32xi32, #tpu.memory_space<vmem>>, vector<1x32xi32>
    %6 = vector.broadcast %5 : vector<1x32xi32> to vector<64x32xi32>
    %7 = arith.addi %4, %6 : vector<64x32xi32>
    %8 = arith.sitofp %7 : vector<64x32xi32> to vector<64x32xf32>
    %cst = arith.constant 8.23180621E-11 : f32
    %9 = vector.broadcast %cst : f32 to vector<64x32xf32>
    %10 = arith.mulf %8, %9 : vector<64x32xf32>
    %11 = arith.truncf %10 : vector<64x32xf32> to vector<64x32xbf16>
    %c0_5 = arith.constant 0 : index
    %c0_6 = arith.constant 0 : index
    %c0_7 = arith.constant 0 : index
    %12 = vector.load %arg4[%c0_5, %c0_6, %c0_7] : memref<2x32x32xbf16, #tpu.memory_space<vmem>>, vector<1x32x32xbf16>
    %13 = vector.shape_cast %12 : vector<1x32x32xbf16> to vector<32x32xbf16>
    %cst_8 = arith.constant dense<0.000000e+00> : vector<64x32xf32>
    %14 = tpu.matmul %11, %13, %cst_8 {dimension_numbers = #tpu.dot_dimension_numbers<[1], [0], [0], [1], [0, 0, 1, 1], [], []>} : vector<64x32xbf16>, vector<32x32xbf16>, vector<64x32xf32> -> vector<64x32xf32>
    %c0_9 = arith.constant 0 : index
    %c0_10 = arith.constant 0 : index
    %c0_11 = arith.constant 0 : index
    %15 = vector.load %arg5[%c0_9, %c0_10, %c0_11] : memref<2x1x32xf32, #tpu.memory_space<vmem>>, vector<1x1x32xf32>
    %16 = vector.shape_cast %15 : vector<1x1x32xf32> to vector<1x32xf32>
    %17 = vector.broadcast %16 : vector<1x32xf32> to vector<64x32xf32>
    %18 = arith.addf %14, %17 : vector<64x32xf32>
    %cst_12 = arith.constant 0.000000e+00 : f32
    %19 = vector.broadcast %cst_12 : f32 to vector<64x32xf32>
    %20 = arith.maximumf %18, %19 : vector<64x32xf32>
    %21 = arith.truncf %20 : vector<64x32xf32> to vector<64x32xbf16>
    %c1 = arith.constant 1 : index
    %c0_13 = arith.constant 0 : index
    %c0_14 = arith.constant 0 : index
    %22 = vector.load %arg4[%c1, %c0_13, %c0_14] : memref<2x32x32xbf16, #tpu.memory_space<vmem>>, vector<1x32x32xbf16>
    %23 = vector.shape_cast %22 : vector<1x32x32xbf16> to vector<32x32xbf16>
    %cst_15 = arith.constant dense<0.000000e+00> : vector<64x32xf32>
    %24 = tpu.matmul %21, %23, %cst_15 {dimension_numbers = #tpu.dot_dimension_numbers<[1], [0], [0], [1], [0, 0, 1, 1], [], []>} : vector<64x32xbf16>, vector<32x32xbf16>, vector<64x32xf32> -> vector<64x32xf32>
    %c1_16 = arith.constant 1 : index
    %c0_17 = arith.constant 0 : index
    %c0_18 = arith.constant 0 : index
    %25 = vector.load %arg5[%c1_16, %c0_17, %c0_18] : memref<2x1x32xf32, #tpu.memory_space<vmem>>, vector<1x1x32xf32>
    %26 = vector.shape_cast %25 : vector<1x1x32xf32> to vector<1x32xf32>
    %27 = vector.broadcast %26 : vector<1x32xf32> to vector<64x32xf32>
    %28 = arith.addf %24, %27 : vector<64x32xf32>
    %cst_19 = arith.constant 0.000000e+00 : f32
    %29 = vector.broadcast %cst_19 : f32 to vector<64x32xf32>
    %30 = arith.maximumf %28, %29 : vector<64x32xf32>
    %31 = arith.truncf %30 : vector<64x32xf32> to vector<64x32xbf16>
    %c0_20 = arith.constant 0 : index
    %c0_21 = arith.constant 0 : index
    %32 = vector.load %arg6[%c0_20, %c0_21] : memref<32x16xbf16, #tpu.memory_space<vmem>>, vector<32x16xbf16>
    %cst_22 = arith.constant dense<0.000000e+00> : vector<64x16xf32>
    %33 = tpu.matmul %31, %32, %cst_22 {dimension_numbers = #tpu.dot_dimension_numbers<[1], [0], [0], [1], [0, 0, 1, 1], [], []>} : vector<64x32xbf16>, vector<32x16xbf16>, vector<64x16xf32> -> vector<64x16xf32>
    %c0_23 = arith.constant 0 : index
    %c0_24 = arith.constant 0 : index
    %34 = vector.load %arg7[%c0_23, %c0_24] : memref<1x16xf32, #tpu.memory_space<vmem>>, vector<1x16xf32>
    %35 = vector.broadcast %34 : vector<1x16xf32> to vector<64x16xf32>
    %36 = arith.addf %33, %35 : vector<64x16xf32>
    %c0_25 = arith.constant 0 : index
    %c0_26 = arith.constant 0 : index
    %37 = vector.load %arg8[%c0_25, %c0_26] : memref<64x16xf32, #tpu.memory_space<vmem>>, vector<64x16xf32>
    tpu.vector_store %arg8[%c0_25, %c0_26], %36 {strides = array<i32>} : memref<64x16xf32, #tpu.memory_space<vmem>>, vector<64x16xf32>,
    return
  }
  func.func @transform_0(%arg0: i32) -> (i32, i32) {
    %c0_i32 = arith.constant 0 : i32
    %c0_i32_0 = arith.constant 0 : i32
    return %arg0, %c0_i32 : i32, i32
  }
  func.func @transform_1(%arg0: i32) -> (i32, i32) {
    %c0_i32 = arith.constant 0 : i32
    %c0_i32_0 = arith.constant 0 : i32
    %c0_i32_1 = arith.constant 0 : i32
    return %c0_i32, %c0_i32_0 : i32, i32
  }
  func.func @transform_2(%arg0: i32) -> (i32, i32) {
    %c0_i32 = arith.constant 0 : i32
    %c0_i32_0 = arith.constant 0 : i32
    %c0_i32_1 = arith.constant 0 : i32
    return %c0_i32, %c0_i32_0 : i32, i32
  }
  func.func @transform_3(%arg0: i32) -> (i32, i32, i32) {
    %c0_i32 = arith.constant 0 : i32
    %c0_i32_0 = arith.constant 0 : i32
    %c0_i32_1 = arith.constant 0 : i32
    %c0_i32_2 = arith.constant 0 : i32
    return %c0_i32, %c0_i32_0, %c0_i32_1 : i32, i32, i32
  }
  func.func @transform_4(%arg0: i32) -> (i32, i32, i32) {
    %c0_i32 = arith.constant 0 : i32
    %c0_i32_0 = arith.constant 0 : i32
    %c0_i32_1 = arith.constant 0 : i32
    %c0_i32_2 = arith.constant 0 : i32
    return %c0_i32, %c0_i32_0, %c0_i32_1 : i32, i32, i32
  }
  func.func @transform_5(%arg0: i32) -> (i32, i32) {
    %c0_i32 = arith.constant 0 : i32
    %c0_i32_0 = arith.constant 0 : i32
    %c0_i32_1 = arith.constant 0 : i32
    return %c0_i32, %c0_i32_0 : i32, i32
  }
  func.func @transform_6(%arg0: i32) -> (i32, i32) {
    %c0_i32 = arith.constant 0 : i32
    %c0_i32_0 = arith.constant 0 : i32
    %c0_i32_1 = arith.constant 0 : i32
    return %c0_i32, %c0_i32_0 : i32, i32
  }
  func.func @transform_7(%arg0: i32) -> (i32, i32) {
    %c0_i32 = arith.constant 0 : i32
    %c0_i32_0 = arith.constant 0 : i32
    return %arg0, %c0_i32 : i32, i32
  }
}

</mosaic_0001>

<llo_original>
// kernel: tpu_custom_call.1
$region0: #{tpu_custom_call.1}
  #allocation0 [shape = 'u32[]', space=smem, size = 0x4, offset = 0x4, fixed_abs, tag = 'smem constant byte address 0x4 - core index']
  #allocation1 [shape = 'u32[144,128]{1,0:T(1,128)}', space=vmem, size = 0x12000, scoped, tag = 'internal scratch']
  %s0 = inlined_call_operand.vmem [shape: s32[128,1], index: 0, kind: input, shape index: {}]
  %s1 = inlined_call_operand.vmem [shape: s32[1,32], index: 1, kind: input, shape index: {}]
  %s2 = inlined_call_operand.vmem [shape: s32[1,32], index: 2, kind: input, shape index: {}]
  %s3 = inlined_call_operand.vmem [shape: bf16[2,32,32], index: 3, kind: input, shape index: {}]
  %s4 = inlined_call_operand.vmem [shape: f32[2,1,32], index: 4, kind: input, shape index: {}]
  %s5 = inlined_call_operand.vmem [shape: bf16[32,16], index: 5, kind: input, shape index: {}]
  %s6 = inlined_call_operand.vmem [shape: f32[1,16], index: 6, kind: input, shape index: {}]
  %s7 = inlined_call_operand.vmem [shape: f32[128,16], index: 7, kind: output, shape index: {}]
  %s8 = sld [smem:[#allocation0]]
  $region61: #{tpu_custom_call.1} parent=0
    _
  %s10 = ssub.s32 1, %s8
  %s11 = scalar_select 0, %s10, %s8
  loop: start=0, step=1, limit=4
  $region2: #{tpu_custom_call.1} parent=0 // loop_pre_header
    _
  $region3: #{tpu_custom_call.1} parent=0 // loop_header
    %s13 = sphi 0, %s17
    %p14 = scmp.ge.s32.totalorder %s13, 4
    %s23 = sphi 0, %s25
    %s26 = sphi 0, %s23
    %s27 = sphi 0, %s26
    %s43 = sphi 0, %s27
    %s47 = sphi 0, %s47
    %s49 = sphi 0, %s47
    %s50 = sphi 0, %s49
    %s64 = sphi 0, %s50
    %s68 = sphi 0, %s68
    %s70 = sphi 0, %s68
    %s71 = sphi 0, %s70
    %s85 = sphi 0, %s71
    %s89 = sphi 0, %s89
    %s91 = sphi 0, %s89
    %s92 = sphi 0, %s91
    %s106 = sphi 0, %s92
    %s110 = sphi 0, %s110
    %s112 = sphi 0, %s110
    %s113 = sphi 0, %s112
    %s127 = sphi 0, %s113
    %s131 = sphi 0, %s131
    %s133 = sphi 0, %s131
    %s134 = sphi 0, %s133
    %s148 = sphi 0, %s134
    %s152 = sphi 0, %s152
    %s154 = sphi 0, %s152
    %s155 = sphi 0, %s154
    %s169 = sphi 0, %s155
    %s175 = sphi 0, %s177
    %s178 = sphi 0, %s175
    %s179 = sphi 0, %s178
    %s195 = sphi 0, %s179
  $region4: #{tpu_custom_call.1} parent=0 // loop_header_branch
    %16 = sbr.rel (%p14) target = $region8
  $region5: #{tpu_custom_call.1} parent=0 // loop_body
    %s18 = ssub.s32 %s13, 1
    %s19 = ssub.s32 %s13, 2
    %s20 = sadd.s32 %s13, 1
    %s21 = ssub.s32 %s13, %s20
    %p22 = scmp.eq.s32.totalorder %s21, 0
    %s24 = sadd.s32 %s23, 1
    %s25 = scalar_select %p22, %s23, %s24
    %p28 = pneg %p22
    %p29 = scmp.eq.s32.totalorder %s13, 1
    %p30 = por %p28, %p29
    %p31 = scmp.ne.s32.totalorder %s23, %s26
    %p32 = scmp.eq.s32.totalorder %s13, 0
    %p33 = por %p31, %p32
    %p34 = scmp.ne.s32.totalorder %s23, %s26
    %p35 = scmp.eq.s32.totalorder %s18, 1
    %p36 = por %p34, %p35
    %p37 = scmp.ne.s32.totalorder %s26, %s27
    %p38 = scmp.eq.s32.totalorder %s18, 0
    %p39 = por %p37, %p38
    %p40 = scmp.ne.s32.totalorder %s26, %s27
    %p41 = scmp.eq.s32.totalorder %s19, 1
    %p42 = por %p40, %p41
    %p44 = scmp.ne.s32.totalorder %s27, %s43
    %p45 = scmp.eq.s32.totalorder %s19, 0
    %p46 = por %p44, %p45
    %s48 = sadd.s32 %s47, 1
    %p51 = scmp.eq.s32.totalorder %s13, 1
    %p52 = scmp.ne.s32.totalorder %s47, %s49
    %p53 = scmp.eq.s32.totalorder %s13, 0
    %p54 = por %p52, %p53
    %p55 = scmp.ne.s32.totalorder %s47, %s49
    %p56 = scmp.eq.s32.totalorder %s18, 1
    %p57 = por %p55, %p56
    %p58 = scmp.ne.s32.totalorder %s49, %s50
    %p59 = scmp.eq.s32.totalorder %s18, 0
    %p60 = por %p58, %p59
    %p61 = scmp.ne.s32.totalorder %s49, %s50
    %p62 = scmp.eq.s32.totalorder %s19, 1
    %p63 = por %p61, %p62
    %p65 = scmp.ne.s32.totalorder %s50, %s64
    %p66 = scmp.eq.s32.totalorder %s19, 0
    %p67 = por %p65, %p66
    %s69 = sadd.s32 %s68, 1
    %p72 = scmp.eq.s32.totalorder %s13, 1
    %p73 = scmp.ne.s32.totalorder %s68, %s70
    %p74 = scmp.eq.s32.totalorder %s13, 0
    %p75 = por %p73, %p74
    %p76 = scmp.ne.s32.totalorder %s68, %s70
    %p77 = scmp.eq.s32.totalorder %s18, 1
    %p78 = por %p76, %p77
    %p79 = scmp.ne.s32.totalorder %s70, %s71
    %p80 = scmp.eq.s32.totalorder %s18, 0
    %p81 = por %p79, %p80
    %p82 = scmp.ne.s32.totalorder %s70, %s71
    %p83 = scmp.eq.s32.totalorder %s19, 1
    %p84 = por %p82, %p83
    %p86 = scmp.ne.s32.totalorder %s71, %s85
    %p87 = scmp.eq.s32.totalorder %s19, 0
    %p88 = por %p86, %p87
    %s90 = sadd.s32 %s89, 1
    %p93 = scmp.eq.s32.totalorder %s13, 1
    %p94 = scmp.ne.s32.totalorder %s89, %s91
    %p95 = scmp.eq.s32.totalorder %s13, 0
    %p96 = por %p94, %p95
    %p97 = scmp.ne.s32.totalorder %s89, %s91
    %p98 = scmp.eq.s32.totalorder %s18, 1
    %p99 = por %p97, %p98
    %p100 = scmp.ne.s32.totalorder %s91, %s92
    %p101 = scmp.eq.s32.totalorder %s18, 0
    %p102 = por %p100, %p101
    %p103 = scmp.ne.s32.totalorder %s91, %s92
    %p104 = scmp.eq.s32.totalorder %s19, 1
    %p105 = por %p103, %p104
    %p107 = scmp.ne.s32.totalorder %s92, %s106
    %p108 = scmp.eq.s32.totalorder %s19, 0
    %p109 = por %p107, %p108
    %s111 = sadd.s32 %s110, 1
    %p114 = scmp.eq.s32.totalorder %s13, 1
    %p115 = scmp.ne.s32.totalorder %s110, %s112
    %p116 = scmp.eq.s32.totalorder %s13, 0
    %p117 = por %p115, %p116
    %p118 = scmp.ne.s32.totalorder %s110, %s112
    %p119 = scmp.eq.s32.totalorder %s18, 1
    %p120 = por %p118, %p119
    %p121 = scmp.ne.s32.totalorder %s112, %s113
    %p122 = scmp.eq.s32.totalorder %s18, 0
    %p123 = por %p121, %p122
    %p124 = scmp.ne.s32.totalorder %s112, %s113
    %p125 = scmp.eq.s32.totalorder %s19, 1
    %p126 = por %p124, %p125
    %p128 = scmp.ne.s32.totalorder %s113, %s127
    %p129 = scmp.eq.s32.totalorder %s19, 0
    %p130 = por %p128, %p129
    %s132 = sadd.s32 %s131, 1
    %p135 = scmp.eq.s32.totalorder %s13, 1
    %p136 = scmp.ne.s32.totalorder %s131, %s133
    %p137 = scmp.eq.s32.totalorder %s13, 0
    %p138 = por %p136, %p137
    %p139 = scmp.ne.s32.totalorder %s131, %s133
    %p140 = scmp.eq.s32.totalorder %s18, 1
    %p141 = por %p139, %p140
    %p142 = scmp.ne.s32.totalorder %s133, %s134
    %p143 = scmp.eq.s32.totalorder %s18, 0
    %p144 = por %p142, %p143
    %p145 = scmp.ne.s32.totalorder %s133, %s134
    %p146 = scmp.eq.s32.totalorder %s19, 1
    %p147 = por %p145, %p146
    %p149 = scmp.ne.s32.totalorder %s134, %s148
    %p150 = scmp.eq.s32.totalorder %s19, 0
    %p151 = por %p149, %p150
    %s153 = sadd.s32 %s152, 1
    %p156 = scmp.eq.s32.totalorder %s13, 1
    %p157 = scmp.ne.s32.totalorder %s152, %s154
    %p158 = scmp.eq.s32.totalorder %s13, 0
    %p159 = por %p157, %p158
    %p160 = scmp.ne.s32.totalorder %s152, %s154
    %p161 = scmp.eq.s32.totalorder %s18, 1
    %p162 = por %p160, %p161
    %p163 = scmp.ne.s32.totalorder %s154, %s155
    %p164 = scmp.eq.s32.totalorder %s18, 0
    %p165 = por %p163, %p164
    %p166 = scmp.ne.s32.totalorder %s154, %s155
    %p167 = scmp.eq.s32.totalorder %s19, 1
    %p168 = por %p166, %p167
    %p170 = scmp.ne.s32.totalorder %s155, %s169
    %p171 = scmp.eq.s32.totalorder %s19, 0
    %p172 = por %p170, %p171
    %s173 = ssub.s32 %s13, %s20
    %p174 = scmp.eq.s32.totalorder %s173, 0
    %s176 = sadd.s32 %s175, 1
    %s177 = scalar_select %p174, %s175, %s176
    %p180 = pneg %p174
    %p181 = scmp.eq.s32.totalorder %s13, 1
    %p182 = por %p180, %p181
    %p183 = scmp.ne.s32.totalorder %s175, %s178
    %p184 = scmp.eq.s32.totalorder %s13, 0
    %p185 = por %p183, %p184
    %p186 = scmp.ne.s32.totalorder %s175, %s178
    %p187 = scmp.eq.s32.totalorder %s18, 1
    %p188 = por %p186, %p187
    %p189 = scmp.ne.s32.totalorder %s178, %s179
    %p190 = scmp.eq.s32.totalorder %s18, 0
    %p191 = por %p189, %p190
    %p192 = scmp.ne.s32.totalorder %s178, %s179
    %p193 = scmp.eq.s32.totalorder %s19, 1
    %p194 = por %p192, %p193
    %p196 = scmp.ne.s32.totalorder %s179, %s195
    %p197 = scmp.eq.s32.totalorder %s19, 0
    %p198 = por %p196, %p197
    %p199 = scmp.le.s32.totalorder 1, %s13
    %p200 = scmp.lt.s32.totalorder %s13, 3
    %p201 = pnand %p199, %p200
    %p202 = pneg %p201
    // Predicated region
    $region9: #{tpu_custom_call.1} parent=5 // pred_check
      _
    $region10: #{tpu_custom_call.1} parent=5 // pred_check_branch
      %204 = sbr.rel (%p201) target = $region12
    $region11: #{tpu_custom_call.1} parent=5 // pred_region
      %s205 = ssub.s32 %s13, 1
      // Predicated region
      $region13: #{tpu_custom_call.1} parent=11 // pred_check
        %p206 = pneg %p60
      $region14: #{tpu_custom_call.1} parent=11 // pred_check_branch
        %208 = sbr.rel (%p206) target = $region16
      $region15: #{tpu_custom_call.1} parent=11 // pred_region
        _
      $region16: #{tpu_custom_call.1} parent=11 // pred_fallthru
        _
      // Predicated region
      $region17: #{tpu_custom_call.1} parent=11 // pred_check
        %p209 = pneg %p81
      $region18: #{tpu_custom_call.1} parent=11 // pred_check_branch
        %211 = sbr.rel (%p209) target = $region20
      $region19: #{tpu_custom_call.1} parent=11 // pred_region
        _
      $region20: #{tpu_custom_call.1} parent=11 // pred_fallthru
        _
      // Predicated region
      $region21: #{tpu_custom_call.1} parent=11 // pred_check
        %p212 = pneg %p102
      $region22: #{tpu_custom_call.1} parent=11 // pred_check_branch
        %214 = sbr.rel (%p212) target = $region24
      $region23: #{tpu_custom_call.1} parent=11 // pred_region
        _
      $region24: #{tpu_custom_call.1} parent=11 // pred_fallthru
        _
      // Predicated region
      $region25: #{tpu_custom_call.1} parent=11 // pred_check
        %p215 = pneg %p123
      $region26: #{tpu_custom_call.1} parent=11 // pred_check_branch
        %217 = sbr.rel (%p215) target = $region28
      $region27: #{tpu_custom_call.1} parent=11 // pred_region
        _
      $region28: #{tpu_custom_call.1} parent=11 // pred_fallthru
        _
      // Predicated region
      $region29: #{tpu_custom_call.1} parent=11 // pred_check
        %p218 = pneg %p144
      $region30: #{tpu_custom_call.1} parent=11 // pred_check_branch
        %220 = sbr.rel (%p218) target = $region32
      $region31: #{tpu_custom_call.1} parent=11 // pred_region
        _
      $region32: #{tpu_custom_call.1} parent=11 // pred_fallthru
        _
      // Predicated region
      $region33: #{tpu_custom_call.1} parent=11 // pred_check
        %p221 = pneg %p165
      $region34: #{tpu_custom_call.1} parent=11 // pred_check_branch
        %223 = sbr.rel (%p221) target = $region36
      $region35: #{tpu_custom_call.1} parent=11 // pred_region
        _
      $region36: #{tpu_custom_call.1} parent=11 // pred_fallthru
        _
    $region12: #{tpu_custom_call.1} parent=5 // pred_fallthru
      _
    %p224 = scmp.lt.s32.totalorder %s13, 2
    // Predicated region
    $region37: #{tpu_custom_call.1} parent=5 // pred_check
      %p225 = pneg %p224
    $region38: #{tpu_custom_call.1} parent=5 // pred_check_branch
      %227 = sbr.rel (%p225) target = $region40
    $region39: #{tpu_custom_call.1} parent=5 // pred_region
      // Predicated region
      $region41: #{tpu_custom_call.1} parent=39 // pred_check
        %p228 = pneg %p33
      $region42: #{tpu_custom_call.1} parent=39 // pred_check_branch
        %230 = sbr.rel (%p228) target = $region44
      $region43: #{tpu_custom_call.1} parent=39 // pred_region
        %s231 = smul.u32 8, %s13
        %p232 = scmp.lt.s32.totalorder %s231, 15
        %s233 = scalar_select %p232, %s231, 15
        %s234 = smul.addr %s233, 8
        %s235 = scalar_lea.vmem %s0, %s234
        %s236 = smul.u32 8, %s13
      $region44: #{tpu_custom_call.1} parent=39 // pred_fallthru
        _
    $region40: #{tpu_custom_call.1} parent=5 // pred_fallthru
      _
    %p237 = scmp.le.s32.totalorder 1, %s13
    %p238 = scmp.lt.s32.totalorder %s13, 3
    %p239 = pnand %p237, %p238
    %p240 = pneg %p239
    // Predicated region
    $region45: #{tpu_custom_call.1} parent=5 // pred_check
      _
    $region46: #{tpu_custom_call.1} parent=5 // pred_check_branch
      %242 = sbr.rel (%p239) target = $region48
    $region47: #{tpu_custom_call.1} parent=5 // pred_region
      %s243 = ssub.s32 %s13, 1
      %s244 = smul.u32 8, %s18
      %p245 = scmp.lt.s32.totalorder %s244, 15
      %s246 = scalar_select %p245, %s244, 15
      %s247 = smul.addr %s246, 8
      %s248 = scalar_lea.vmem %s0, %s247
      %p249 = pneg %p39
      %p250 = pneg %p36
      %p251 = pneg %p60
      %p252 = pneg %p57
      %p253 = pneg %p81
      %p254 = pneg %p78
      %p255 = pneg %p102
      %p256 = pneg %p99
      %p257 = pneg %p123
      %p258 = pneg %p120
      %p259 = pneg %p144
      %p260 = pneg %p141
      %p261 = pneg %p165
      %p262 = pneg %p162
      %p263 = pneg %p191
      %p264 = pneg %p188
      %s265 = smul.u32 8, %s18
      %p266 = scmp.lt.s32.totalorder %s265, 15
      %s267 = scalar_select %p266, %s265, 15
      %s268 = smul.addr %s267, 8
      %s269 = scalar_lea.vmem %s7, %s268
      %s270 = smul.u32 8, %s18
      %p271 = scmp.lt.s32.totalorder %s270, 15
      %s272 = scalar_select %p271, %s270, 15
      %s273 = smul.addr %s272, 8
      %s274 = scalar_lea.vmem %s0, %s273
      %s275 = smul.u32 8, %s18
      %s276 = smul.u32 8, %s18
      %p277 = scmp.lt.s32.totalorder %s276, 15
      %s278 = scalar_select %p277, %s276, 15
      %s279 = smul.addr %s278, 8
      %s280 = scalar_lea.vmem %s7, %s279
      %s281 = smul.u32 8, %s18
      %v283 = vld [vmem:[%s274] sm:$0xff]
      %v284 = vld [vmem:[%s274 + $0x8] sm:$0xff]
      %v285 = vld [vmem:[%s274 + $0x10] sm:$0xff]
      %v286 = vld [vmem:[%s274 + $0x18] sm:$0xff]
      %v287 = vld [vmem:[%s274 + $0x20] sm:$0xff]
      %v288 = vld [vmem:[%s274 + $0x28] sm:$0xff]
      %v289 = vld [vmem:[%s274 + $0x30] sm:$0xff]
      %v290 = vld [vmem:[%s274 + $0x38] sm:$0xff]
      %v291 = vld [vmem:[%s1] sm:$0x1]
      %292 = vset.pattern.permute.xlu0 0
      %293 = vperm.xlu0 %292, %v283
      %v294 = vpop.permute.xlu0 %293
      %295 = vset.pattern.permute.xlu0 0
      %296 = vperm.xlu0 %295, %v284
      %v297 = vpop.permute.xlu0 %296
      %298 = vset.pattern.permute.xlu0 0
      %299 = vperm.xlu0 %298, %v285
      %v300 = vpop.permute.xlu0 %299
      %301 = vset.pattern.permute.xlu0 0
      %302 = vperm.xlu0 %301, %v286
      %v303 = vpop.permute.xlu0 %302
      %304 = vset.pattern.permute.xlu0 0
      %305 = vperm.xlu0 %304, %v287
      %v306 = vpop.permute.xlu0 %305
      %307 = vset.pattern.permute.xlu0 0
      %308 = vperm.xlu0 %307, %v288
      %v309 = vpop.permute.xlu0 %308
      %310 = vset.pattern.permute.xlu0 0
      %311 = vperm.xlu0 %310, %v289
      %v312 = vpop.permute.xlu0 %311
      %313 = vset.pattern.permute.xlu0 0
      %314 = vperm.xlu0 %313, %v290
      %v315 = vpop.permute.xlu0 %314
      %v316 = vlaneseq
      %v317 = vshrl.u32 %v316, 7
      %v318 = vsub.s32 0, %v317
      %v319 = vrot.slane %v291, %v318
      %v320 = vmul.u32 %v294, %v319
      %v321 = vmul.u32 %v297, %v319
      %v322 = vmul.u32 %v300, %v319
      %v323 = vmul.u32 %v303, %v319
      %v324 = vmul.u32 %v306, %v319
      %v325 = vmul.u32 %v309, %v319
      %v326 = vmul.u32 %v312, %v319
      %v327 = vmul.u32 %v315, %v319
      %v328 = vld [vmem:[%s2] sm:$0x1]
      %v329 = vlaneseq
      %v330 = vshrl.u32 %v329, 7
      %v331 = vsub.s32 0, %v330
      %v332 = vrot.slane %v328, %v331
      %v333 = vadd.s32 %v320, %v332
      %v334 = vadd.s32 %v321, %v332
      %v335 = vadd.s32 %v322, %v332
      %v336 = vadd.s32 %v323, %v332
      %v337 = vadd.s32 %v324, %v332
      %v338 = vadd.s32 %v325, %v332
      %v339 = vadd.s32 %v326, %v332
      %v340 = vadd.s32 %v327, %v332
      %v341 = vcvt.s32.f32 %v333
      %v342 = vcvt.s32.f32 %v334
      %v343 = vcvt.s32.f32 %v335
      %v344 = vcvt.s32.f32 %v336
      %v345 = vcvt.s32.f32 %v337
      %v346 = vcvt.s32.f32 %v338
      %v347 = vcvt.s32.f32 %v339
      %v348 = vcvt.s32.f32 %v340
      %v349 = vmul.f32 %v341, 8.231806e-11
      %v350 = vmul.f32 %v342, 8.231806e-11
      %v351 = vmul.f32 %v343, 8.231806e-11
      %v352 = vmul.f32 %v344, 8.231806e-11
      %v353 = vmul.f32 %v345, 8.231806e-11
      %v354 = vmul.f32 %v346, 8.231806e-11
      %v355 = vmul.f32 %v347, 8.231806e-11
      %v356 = vmul.f32 %v348, 8.231806e-11
      %v357 = vpack.c.bf16 %v350, %v349
      %v358 = vpack.c.bf16 %v352, %v351
      %v359 = vpack.c.bf16 %v354, %v353
      %v360 = vpack.c.bf16 %v356, %v355
      %v361 = vld [vmem:[%s3] sm:$0xf]
      %v362 = vld [vmem:[%s3 + $0x4] sm:$0xf]
      %v363 = vld [vmem:[%s3 + $0x8] sm:$0xf]
      %v364 = vld [vmem:[%s3 + $0xc] sm:$0xf]
      %v365 = vld [vmem:[%s4] sm:$0x1]
      %v367 = vlaneseq
      %v368 = vshrl.u32 %v367, 7
      %v369 = vsub.s32 0, %v368
      %v370 = vrot.slane %v365, %v369
      %v376 = vunpack.c.l.b16 %v361
      %v377 = vunpack.c.l.b16 %v362
      %v378 = vunpack.c.l.b16 %v363
      %v379 = vunpack.c.l.b16 %v364
      %v380 = vpack.c.b16 %v377, %v376
      %v381 = vpack.c.b16 %v379, %v378
      %vm384 = vcmask 261120
      %v386 = vsel %vm384, %v357, 0
      %v389 = vsel %vm384, %v358, 0
      %v392 = vsel %vm384, %v359, 0
      %v395 = vsel %vm384, %v360, 0
      %397 = vmatprep.subr.bf16.mxu0 0
      %398 = vmatpush1.bf16.msra.mxu0 %v380
      %399 = vmatprep.subr.bf16.mxu0 0
      %400 = vmatpush1.bf16.msra.mxu0 %v381
      %401 = vmatprep.subr.bf16.mxu0 0
      %402 = vmatpush1.bf16.msra.mxu0 0
      %403 = vmatprep.subr.bf16.mxu0 0
      %404 = vmatpush1.bf16.msra.mxu0 0
      %405 = vmatprep.subr.bf16.mxu0 0
      %406 = vmatpush1.bf16.msra.mxu0 0
      %407 = vmatprep.subr.bf16.mxu0 0
      %408 = vmatpush1.bf16.msra.mxu0 0
      %409 = vmatprep.subr.bf16.mxu0 0
      %410 = vmatpush1.bf16.msra.mxu0 0
      %411 = vmatprep.subr.bf16.mxu0 0
      %412 = vmatpush1.bf16.msra.mxu0 0
      %413 = vmatprep.subr.bf16.mxu0 0
      %414 = vmatpush1.bf16.msra.mxu0 0
      %415 = vmatprep.subr.bf16.mxu0 0
      %416 = vmatpush1.bf16.msra.mxu0 0
      %417 = vmatprep.subr.bf16.mxu0 0
      %418 = vmatpush1.bf16.msra.mxu0 0
      %419 = vmatprep.subr.bf16.mxu0 0
      %420 = vmatpush1.bf16.msra.mxu0 0
      %421 = vmatprep.subr.bf16.mxu0 0
      %422 = vmatpush1.bf16.msra.mxu0 0
      %423 = vmatprep.subr.bf16.mxu0 0
      %424 = vmatpush1.bf16.msra.mxu0 0
      %425 = vmatprep.subr.bf16.mxu0 0
      %426 = vmatpush1.bf16.msra.mxu0 0
      %427 = vmatprep.subr.bf16.mxu0 0
      %428 = vmatpush1.bf16.msra.mxu0 0
      %429 = vmatprep.mubr.bf16.mxu0 0
      %430 = vmatmul.mubr.bf16.gmra.mrb[0].mxu0 %v386
      %v431 = vpop.f32.mrb[0].mxu0
      %v432 = vadd.f32 %v370, %v431
      %v433 = vpop.f32.mrb[0].mxu0
      %v434 = vpop.f32.mrb[0].mxu0
      %v435 = vadd.f32 %v370, %v434
      %v436 = vpop.f32.mrb[0].mxu0
      %437 = vmatprep.mubr.bf16.mxu0 0
      %438 = vmatmul.mubr.bf16.gmra.mrb[0].mxu0 %v389
      %v439 = vpop.f32.mrb[0].mxu0
      %v440 = vadd.f32 %v370, %v439
      %v441 = vpop.f32.mrb[0].mxu0
      %v442 = vpop.f32.mrb[0].mxu0
      %v443 = vadd.f32 %v370, %v442
      %v444 = vpop.f32.mrb[0].mxu0
      %445 = vmatprep.mubr.bf16.mxu0 0
      %446 = vmatmul.mubr.bf16.gmra.mrb[0].mxu0 %v392
      %v447 = vpop.f32.mrb[0].mxu0
      %v448 = vadd.f32 %v370, %v447
      %v449 = vpop.f32.mrb[0].mxu0
      %v450 = vpop.f32.mrb[0].mxu0
      %v451 = vadd.f32 %v370, %v450
      %v452 = vpop.f32.mrb[0].mxu0
      %453 = vmatprep.mubr.bf16.mxu0 0
      %454 = vmatmul.mubr.bf16.gmra.mrb[0].mxu0 %v395
      %v455 = vpop.f32.mrb[0].mxu0
      %v456 = vadd.f32 %v370, %v455
      %v457 = vpop.f32.mrb[0].mxu0
      %v458 = vpop.f32.mrb[0].mxu0
      %v459 = vadd.f32 %v370, %v458
      %v460 = vpop.f32.mrb[0].mxu0
      %461 = vdwg.mxu0
      %v462 = vmax.f32 %v432, 0.0
      %v463 = vmax.f32 %v435, 0.0
      %v464 = vmax.f32 %v440, 0.0
      %v465 = vmax.f32 %v443, 0.0
      %v466 = vmax.f32 %v448, 0.0
      %v467 = vmax.f32 %v451, 0.0
      %v468 = vmax.f32 %v456, 0.0
      %v469 = vmax.f32 %v459, 0.0
      %v470 = vpack.c.bf16 %v463, %v462
      %v471 = vpack.c.bf16 %v465, %v464
      %v472 = vpack.c.bf16 %v467, %v466
      %v473 = vpack.c.bf16 %v469, %v468
      %s474 = scalar_lea.vmem %s3, 16
      %v475 = vld [vmem:[%s474] sm:$0xf]
      %v476 = vld [vmem:[%s474 + $0x4] sm:$0xf]
      %v477 = vld [vmem:[%s474 + $0x8] sm:$0xf]
      %v478 = vld [vmem:[%s474 + $0xc] sm:$0xf]
      %s479 = scalar_lea.vmem %s4, 1
      %v480 = vld [vmem:[%s479] sm:$0x1]
      %v482 = vlaneseq
      %v483 = vshrl.u32 %v482, 7
      %v484 = vsub.s32 0, %v483
      %v485 = vrot.slane %v480, %v484
      %v491 = vunpack.c.l.b16 %v475
      %v492 = vunpack.c.l.b16 %v476
      %v493 = vunpack.c.l.b16 %v477
      %v494 = vunpack.c.l.b16 %v478
      %v495 = vpack.c.b16 %v492, %v491
      %v496 = vpack.c.b16 %v494, %v493
      %v500 = vsel %vm384, %v470, 0
      %v503 = vsel %vm384, %v471, 0
      %v506 = vsel %vm384, %v472, 0
      %v509 = vsel %vm384, %v473, 0
      %511 = vmatprep.subr.bf16.mxu0 0
      %512 = vmatpush1.bf16.msra.mxu0 %v495
      %513 = vmatprep.subr.bf16.mxu0 0
      %514 = vmatpush1.bf16.msra.mxu0 %v496
      %515 = vmatprep.subr.bf16.mxu0 0
      %516 = vmatpush1.bf16.msra.mxu0 0
      %517 = vmatprep.subr.bf16.mxu0 0
      %518 = vmatpush1.bf16.msra.mxu0 0
      %519 = vmatprep.subr.bf16.mxu0 0
      %520 = vmatpush1.bf16.msra.mxu0 0
      %521 = vmatprep.subr.bf16.mxu0 0
      %522 = vmatpush1.bf16.msra.mxu0 0
      %523 = vmatprep.subr.bf16.mxu0 0
      %524 = vmatpush1.bf16.msra.mxu0 0
      %525 = vmatprep.subr.bf16.mxu0 0
      %526 = vmatpush1.bf16.msra.mxu0 0
      %527 = vmatprep.subr.bf16.mxu0 0
      %528 = vmatpush1.bf16.msra.mxu0 0
      %529 = vmatprep.subr.bf16.mxu0 0
      %530 = vmatpush1.bf16.msra.mxu0 0
      %531 = vmatprep.subr.bf16.mxu0 0
      %532 = vmatpush1.bf16.msra.mxu0 0
      %533 = vmatprep.subr.bf16.mxu0 0
      %534 = vmatpush1.bf16.msra.mxu0 0
      %535 = vmatprep.subr.bf16.mxu0 0
      %536 = vmatpush1.bf16.msra.mxu0 0
      %537 = vmatprep.subr.bf16.mxu0 0
      %538 = vmatpush1.bf16.msra.mxu0 0
      %539 = vmatprep.subr.bf16.mxu0 0
      %540 = vmatpush1.bf16.msra.mxu0 0
      %541 = vmatprep.subr.bf16.mxu0 0
      %542 = vmatpush1.bf16.msra.mxu0 0
      %543 = vmatprep.mubr.bf16.mxu0 0
      %544 = vmatmul.mubr.bf16.gmra.mrb[0].mxu0 %v500
      %v545 = vpop.f32.mrb[0].mxu0
      %v546 = vadd.f32 %v485, %v545
      %v547 = vpop.f32.mrb[0].mxu0
      %v548 = vpop.f32.mrb[0].mxu0
      %v549 = vadd.f32 %v485, %v548
      %v550 = vpop.f32.mrb[0].mxu0
      %551 = vmatprep.mubr.bf16.mxu0 0
      %552 = vmatmul.mubr.bf16.gmra.mrb[0].mxu0 %v503
      %v553 = vpop.f32.mrb[0].mxu0
      %v554 = vadd.f32 %v485, %v553
      %v555 = vpop.f32.mrb[0].mxu0
      %v556 = vpop.f32.mrb[0].mxu0
      %v557 = vadd.f32 %v485, %v556
      %v558 = vpop.f32.mrb[0].mxu0
      %559 = vmatprep.mubr.bf16.mxu0 0
      %560 = vmatmul.mubr.bf16.gmra.mrb[0].mxu0 %v506
      %v561 = vpop.f32.mrb[0].mxu0
      %v562 = vadd.f32 %v485, %v561
      %v563 = vpop.f32.mrb[0].mxu0
      %v564 = vpop.f32.mrb[0].mxu0
      %v565 = vadd.f32 %v485, %v564
      %v566 = vpop.f32.mrb[0].mxu0
      %567 = vmatprep.mubr.bf16.mxu0 0
      %568 = vmatmul.mubr.bf16.gmra.mrb[0].mxu0 %v509
      %v569 = vpop.f32.mrb[0].mxu0
      %v570 = vadd.f32 %v485, %v569
      %v571 = vpop.f32.mrb[0].mxu0
      %v572 = vpop.f32.mrb[0].mxu0
      %v573 = vadd.f32 %v485, %v572
      %v574 = vpop.f32.mrb[0].mxu0
      %575 = vdwg.mxu0
      %v576 = vmax.f32 %v546, 0.0
      %v577 = vmax.f32 %v549, 0.0
      %v578 = vmax.f32 %v554, 0.0
      %v579 = vmax.f32 %v557, 0.0
      %v580 = vmax.f32 %v562, 0.0
      %v581 = vmax.f32 %v565, 0.0
      %v582 = vmax.f32 %v570, 0.0
      %v583 = vmax.f32 %v573, 0.0
      %v584 = vpack.c.bf16 %v577, %v576
      %v585 = vpack.c.bf16 %v579, %v578
      %v586 = vpack.c.bf16 %v581, %v580
      %v587 = vpack.c.bf16 %v583, %v582
      %v588 = vld [vmem:[%s5] sm:$0xf]
      %v589 = vld [vmem:[%s5 + $0x4] sm:$0xf]
      %v590 = vld [vmem:[%s5 + $0x8] sm:$0xf]
      %v591 = vld [vmem:[%s5 + $0xc] sm:$0xf]
      %v592 = vld [vmem:[%s6] sm:$0x1]
      %v594 = vlaneseq
      %v595 = vshrl.u32 %v594, 7
      %v596 = vsub.s32 0, %v595
      %v597 = vrot.slane %v592, %v596
      %v603 = vunpack.c.l.b16 %v588
      %v604 = vunpack.c.l.b16 %v589
      %v605 = vunpack.c.l.b16 %v590
      %v606 = vunpack.c.l.b16 %v591
      %v607 = vpack.c.b16 %v604, %v603
      %v608 = vpack.c.b16 %v606, %v605
      %v612 = vsel %vm384, %v584, 0
      %v615 = vsel %vm384, %v585, 0
      %v618 = vsel %vm384, %v586, 0
      %v621 = vsel %vm384, %v587, 0
      %623 = vmatprep.subr.bf16.mxu0 0
      %624 = vmatpush1.bf16.msra.mxu0 %v607
      %625 = vmatprep.subr.bf16.mxu0 0
      %626 = vmatpush1.bf16.msra.mxu0 %v608
      %627 = vmatprep.subr.bf16.mxu0 0
      %628 = vmatpush1.bf16.msra.mxu0 0
      %629 = vmatprep.subr.bf16.mxu0 0
      %630 = vmatpush1.bf16.msra.mxu0 0
      %631 = vmatprep.subr.bf16.mxu0 0
      %632 = vmatpush1.bf16.msra.mxu0 0
      %633 = vmatprep.subr.bf16.mxu0 0
      %634 = vmatpush1.bf16.msra.mxu0 0
      %635 = vmatprep.subr.bf16.mxu0 0
      %636 = vmatpush1.bf16.msra.mxu0 0
      %637 = vmatprep.subr.bf16.mxu0 0
      %638 = vmatpush1.bf16.msra.mxu0 0
      %639 = vmatprep.subr.bf16.mxu0 0
      %640 = vmatpush1.bf16.msra.mxu0 0
      %641 = vmatprep.subr.bf16.mxu0 0
      %642 = vmatpush1.bf16.msra.mxu0 0
      %643 = vmatprep.subr.bf16.mxu0 0
      %644 = vmatpush1.bf16.msra.mxu0 0
      %645 = vmatprep.subr.bf16.mxu0 0
      %646 = vmatpush1.bf16.msra.mxu0 0
      %647 = vmatprep.subr.bf16.mxu0 0
      %648 = vmatpush1.bf16.msra.mxu0 0
      %649 = vmatprep.subr.bf16.mxu0 0
      %650 = vmatpush1.bf16.msra.mxu0 0
      %651 = vmatprep.subr.bf16.mxu0 0
      %652 = vmatpush1.bf16.msra.mxu0 0
      %653 = vmatprep.subr.bf16.mxu0 0
      %654 = vmatpush1.bf16.msra.mxu0 0
      %655 = vmatprep.mubr.bf16.mxu0 0
      %656 = vmatmul.mubr.bf16.gmra.mrb[0].mxu0 %v612
      %v657 = vpop.f32.mrb[0].mxu0
      %v658 = vadd.f32 %v597, %v657
      %v659 = vpop.f32.mrb[0].mxu0
      %v660 = vpop.f32.mrb[0].mxu0
      %v661 = vadd.f32 %v597, %v660
      %v662 = vpop.f32.mrb[0].mxu0
      %663 = vmatprep.mubr.bf16.mxu0 0
      %664 = vmatmul.mubr.bf16.gmra.mrb[0].mxu0 %v615
      %v665 = vpop.f32.mrb[0].mxu0
      %v666 = vadd.f32 %v597, %v665
      %v667 = vpop.f32.mrb[0].mxu0
      %v668 = vpop.f32.mrb[0].mxu0
      %v669 = vadd.f32 %v597, %v668
      %v670 = vpop.f32.mrb[0].mxu0
      %671 = vmatprep.mubr.bf16.mxu0 0
      %672 = vmatmul.mubr.bf16.gmra.mrb[0].mxu0 %v618
      %v673 = vpop.f32.mrb[0].mxu0
      %v674 = vadd.f32 %v597, %v673
      %v675 = vpop.f32.mrb[0].mxu0
      %v676 = vpop.f32.mrb[0].mxu0
      %v677 = vadd.f32 %v597, %v676
      %v678 = vpop.f32.mrb[0].mxu0
      %679 = vmatprep.mubr.bf16.mxu0 0
      %680 = vmatmul.mubr.bf16.gmra.mrb[0].mxu0 %v621
      %v681 = vpop.f32.mrb[0].mxu0
      %v682 = vadd.f32 %v597, %v681
      %v683 = vpop.f32.mrb[0].mxu0
      %v684 = vpop.f32.mrb[0].mxu0
      %v685 = vadd.f32 %v597, %v684
      %v686 = vpop.f32.mrb[0].mxu0
      %687 = vdwg.mxu0
      %vm688 = vcmask 130048
      %689 = vst.msk [vmem:[%s280] sm:$0xff] %vm688, %v658
      %690 = vst.msk [vmem:[%s280 + $0x8] sm:$0xff] %vm688, %v661
      %691 = vst.msk [vmem:[%s280 + $0x10] sm:$0xff] %vm688, %v666
      %692 = vst.msk [vmem:[%s280 + $0x18] sm:$0xff] %vm688, %v669
      %693 = vst.msk [vmem:[%s280 + $0x20] sm:$0xff] %vm688, %v674
      %694 = vst.msk [vmem:[%s280 + $0x28] sm:$0xff] %vm688, %v677
      %695 = vst.msk [vmem:[%s280 + $0x30] sm:$0xff] %vm688, %v682
      %696 = vst.msk [vmem:[%s280 + $0x38] sm:$0xff] %vm688, %v685
      %s697 = smul.u32 8, %s18
      %p698 = scmp.lt.s32.totalorder %s697, 15
      %s699 = scalar_select %p698, %s697, 15
      %s700 = smul.addr %s699, 8
      %s701 = scalar_lea.vmem %s7, %s700
      // Predicated region
      $region49: #{tpu_custom_call.1} parent=47 // pred_check
        %p702 = pneg %p188
      $region50: #{tpu_custom_call.1} parent=47 // pred_check_branch
        %704 = sbr.rel (%p702) target = $region52
      $region51: #{tpu_custom_call.1} parent=47 // pred_region
        %s705 = smul.u32 8, %s18
      $region52: #{tpu_custom_call.1} parent=47 // pred_fallthru
        _
    $region48: #{tpu_custom_call.1} parent=5 // pred_fallthru
      _
    %p706 = scmp.le.s32.totalorder 2, %s13
    // Predicated region
    $region53: #{tpu_custom_call.1} parent=5 // pred_check
      %p707 = pneg %p706
    $region54: #{tpu_custom_call.1} parent=5 // pred_check_branch
      %709 = sbr.rel (%p707) target = $region56
    $region55: #{tpu_custom_call.1} parent=5 // pred_region
      %s710 = ssub.s32 %s13, 2
      // Predicated region
      $region57: #{tpu_custom_call.1} parent=55 // pred_check
        %p711 = pneg %p194
      $region58: #{tpu_custom_call.1} parent=55 // pred_check_branch
        %713 = sbr.rel (%p711) target = $region60
      $region59: #{tpu_custom_call.1} parent=55 // pred_region
        %s714 = smul.u32 8, %s19
        %p715 = scmp.lt.s32.totalorder %s714, 15
        %s716 = scalar_select %p715, %s714, 15
        %s717 = smul.addr %s716, 8
        %s718 = scalar_lea.vmem %s7, %s717
      $region60: #{tpu_custom_call.1} parent=55 // pred_fallthru
        _
    $region56: #{tpu_custom_call.1} parent=5 // pred_fallthru
      _
  $region6: #{tpu_custom_call.1} parent=0 // loop_footer
    %s17 = sadd.s32 1, %s13
  $region7: #{tpu_custom_call.1} parent=0 // loop_footer_branch
    %12 = sbr.rel target = $region3
  $region8: #{tpu_custom_call.1} parent=0 // loop_exit
    _

</llo_original>
